<compile_context>
chip_gen: v7x
topology: tpu7x:2x2x1
jax: 0.10.0
libtpu: 0.0.40
codegen_flags: <defaults>
</compile_context>

<pallas_src>
import functools

import jax
import jax.numpy as jnp
from jax import lax
from jax.experimental import pallas as pl
from jax.experimental.pallas import tpu as pltpu


def churn_kernel(x_ref, w1_ref, b1_ref, w2_ref, b2_ref, o_ref):
    # x_ref: (tb, F) f32 batch-major tile (one contiguous DMA per grid step).
    # h^T = relu(W1 @ x^T + b1): contract the feature axes so the result is
    # (H, tb) with the batch on the 128-lane axis (MXU N dim = tb, not 1).
    h = lax.dot_general(
        w1_ref[...], x_ref[...],
        dimension_numbers=(((1,), (1,)), ((), ())),
        preferred_element_type=jnp.float32)               # (H, tb) f32
    h = jnp.maximum(h + b1_ref[...], 0.0)                 # b1 (H, 1) broadcasts over lanes

    # Second layer on the VPU/XLU: z = sum_H(h * w2_col) + b2 -> (1, tb).
    # Avoids an M=1 MXU push and the bf16 cast of the whole (H, tb) intermediate.
    z = jnp.sum(h * w2_ref[...], axis=0, keepdims=True) + b2_ref[0]

    # Numerically-stable exact sigmoid: exp(-|z|) never overflows.
    e = jnp.exp(-jnp.abs(z))                              # EUP
    r = 1.0 / (1.0 + e)                                   # exact (memory-bound, free)
    o_ref[...] = jnp.where(z >= 0, r, e * r).astype(o_ref.dtype)


def _round_up(n, m):
    return ((n + m - 1) // m) * m


def _cdiv(a, b):
    return -(-a // b)


@functools.partial(jax.jit, static_argnames=("tb",))
def churn_forward(x, w1, b1, w2, b2, *, tb=2048):
    """x: (B, F) f32; w1: (H, F); b1: (H,); w2: (1, H); b2: (1,). Returns (B, 1) f32."""
    B, F = x.shape
    H = w1.shape[0]

    # Batch tile: multiple of 128 (lane axis), large enough to amortize the
    # ~0.35 us per-grid-step overhead, but clamped so the grid keeps >= 2 steps
    # when B allows it (both v7x TensorCores get work on the "parallel" axis).
    tb = max(128, min(_round_up(tb, 128), _round_up(_cdiv(B, 2), 128)))
    grid = (_cdiv(B, tb),)                                 # ragged tail -> masked boundary block

    # TODO(synk): if xprof ever shows exposed DMA on the x tile at very small F,
    # deepen its pipelining (pipeline_mode=pl.Buffered(3)) on the x BlockSpec only.
    out = pl.pallas_call(
        churn_kernel,
        out_shape=jax.ShapeDtypeStruct((1, B), jnp.float32),
        grid_spec=pltpu.PrefetchScalarGridSpec(
            num_scalar_prefetch=0,
            grid=grid,
            in_specs=[
                pl.BlockSpec((tb, F), lambda i: (i, 0)),            # x tile, contiguous, batch-major
                pl.BlockSpec((H, F), lambda i: (0, 0)),             # W1, resident in VMEM
                pl.BlockSpec((H, 1), lambda i: (0, 0)),             # b1 column, resident
                pl.BlockSpec((H, 1), lambda i: (0, 0)),             # w2 column (w2^T), resident
                pl.BlockSpec(memory_space=pltpu.MemorySpace.SMEM),  # b2 scalar
            ],
            out_specs=pl.BlockSpec((1, tb), lambda i: (0, i)),      # lane-dense store
        ),
        compiler_params=pltpu.CompilerParams(
            dimension_semantics=("parallel",)),
    )(x, w1, b1.reshape(H, 1), w2.reshape(H, 1), b2)

    # (1, B) is contiguous -> free reshape to (B, 1); no padding to slice off.
    return out.reshape(B, 1)


def init_params(key, no_of_features):
    """nn.Linear-style init (uniform +-1/sqrt(fan_in)), PyTorch (out, in) layout."""
    F = no_of_features
    H = 2 * F
    k1, k2, k3, k4 = jax.random.split(key, 4)
    bound1 = 1.0 / jnp.sqrt(F)
    bound2 = 1.0 / jnp.sqrt(H)
    w1 = jax.random.uniform(k1, (H, F), jnp.float32, -bound1, bound1)  # linear1.weight
    b1 = jax.random.uniform(k2, (H,), jnp.float32, -bound1, bound1)    # linear1.bias
    w2 = jax.random.uniform(k3, (1, H), jnp.float32, -bound2, bound2)  # linear2.weight
    b2 = jax.random.uniform(k4, (1,), jnp.float32, -bound2, bound2)    # linear2.bias
    return w1, b1, w2, b2


def reference_forward(x, w1, b1, w2, b2):
    """Pure-JAX f32 reference mirroring the PyTorch module."""
    h = jnp.maximum(jnp.dot(x, w1.T, preferred_element_type=jnp.float32) + b1, 0.0)
    z = jnp.dot(h, w2.T, preferred_element_type=jnp.float32) + b2
    return jax.nn.sigmoid(z)


if __name__ == "__main__":
    key = jax.random.PRNGKey(0)
    kx_small, kx_big, kp = jax.random.split(key, 3)

    no_of_features = 16                      # small tabular churn model
    w1, b1, w2, b2 = init_params(kp, no_of_features)

    # Tiny batch (single boundary-masked tile, grid=1) and a ragged larger batch
    # (tb clamped to 512 -> grid=2, shards across TCs on v7x, masked tail block).
    for batch, kx in ((8, kx_small), (1000, kx_big)):
        x = jax.random.normal(kx, (batch, no_of_features), jnp.float32)
        out = jax.block_until_ready(churn_forward(x, w1, b1, w2, b2))
        ref = reference_forward(x, w1, b1, w2, b2)
        assert out.shape == (batch, 1)
        assert bool(jnp.all(jnp.isfinite(out)))
        err = float(jnp.max(jnp.abs(out - ref)))
        assert jnp.allclose(out, ref, atol=2e-3, rtol=0), f"max abs err {err}"

    print("KERNEL_OK")
</pallas_src>

<mosaic_0001>
module attributes {stable_mosaic.version = 11 : i64} {
  func.func @churn_kernel(%arg0: i32, %arg1: memref<128x16xf32, #tpu.memory_space<vmem>>, %arg2: memref<32x16xf32, #tpu.memory_space<vmem>>, %arg3: memref<32x1xf32, #tpu.memory_space<vmem>>, %arg4: memref<32x1xf32, #tpu.memory_space<vmem>>, %arg5: memref<1xf32, #tpu.memory_space<smem>>, %arg6: memref<1x128xf32, #tpu.memory_space<vmem>>) attributes {dimension_semantics = [#tpu.dimension_semantics<parallel>], iteration_bounds = array<i64: 1>, scalar_prefetch = 0 : i64, scratch_operands = 0 : i64, tpu.core_type = #tpu.core_type<tc>, window_params = [{transform_indices = @transform_0, window_bounds = array<i64: 128, 16>}, {pipeline_mode = #tpu.pipeline_mode<synchronous>, transform_indices = @transform_1, window_bounds = array<i64: 32, 16>}, {pipeline_mode = #tpu.pipeline_mode<synchronous>, transform_indices = @transform_2, window_bounds = array<i64: 32, 1>}, {pipeline_mode = #tpu.pipeline_mode<synchronous>, transform_indices = @transform_3, window_bounds = array<i64: 32, 1>}, {transform_indices = @transform_4, window_bounds = array<i64: 1>}, {transform_indices = @transform_5, window_bounds = array<i64: 1, 128>}]} {
    %c0 = arith.constant 0 : index
    %c0_0 = arith.constant 0 : index
    %0 = vector.load %arg2[%c0, %c0_0] : memref<32x16xf32, #tpu.memory_space<vmem>>, vector<32x16xf32>
    %c0_1 = arith.constant 0 : index
    %c0_2 = arith.constant 0 : index
    %1 = vector.load %arg1[%c0_1, %c0_2] : memref<128x16xf32, #tpu.memory_space<vmem>>, vector<128x16xf32>
    %cst = arith.constant dense<0.000000e+00> : vector<32x128xf32>
    %2 = tpu.matmul %0, %1, %cst {dimension_numbers = #tpu.dot_dimension_numbers<[1], [1], [0], [0], [0, 0, 1, 0], [], []>} : vector<32x16xf32>, vector<128x16xf32>, vector<32x128xf32> -> vector<32x128xf32>
    %c0_3 = arith.constant 0 : index
    %c0_4 = arith.constant 0 : index
    %3 = vector.load %arg3[%c0_3, %c0_4] : memref<32x1xf32, #tpu.memory_space<vmem>>, vector<32x1xf32>
    %4 = vector.broadcast %3 : vector<32x1xf32> to vector<32x128xf32>
    %5 = arith.addf %2, %4 : vector<32x128xf32>
    %cst_5 = arith.constant 0.000000e+00 : f32
    %6 = vector.broadcast %cst_5 : f32 to vector<32x128xf32>
    %7 = arith.maximumf %5, %6 : vector<32x128xf32>
    %c0_6 = arith.constant 0 : index
    %c0_7 = arith.constant 0 : index
    %8 = vector.load %arg4[%c0_6, %c0_7] : memref<32x1xf32, #tpu.memory_space<vmem>>, vector<32x1xf32>
    %9 = vector.broadcast %8 : vector<32x1xf32> to vector<32x128xf32>
    %10 = arith.mulf %7, %9 : vector<32x128xf32>
    %cst_8 = arith.constant dense<0.000000e+00> : vector<128xf32>
    %11 = vector.multi_reduction <add>, %10, %cst_8 [0] : vector<32x128xf32> to vector<128xf32>
    %12 = vector.shape_cast %11 : vector<128xf32> to vector<1x128xf32>
    %c0_9 = arith.constant 0 : index
    %13 = memref.load %arg5[%c0_9] : memref<1xf32, #tpu.memory_space<smem>>
    %14 = vector.broadcast %13 : f32 to vector<1x128xf32>
    %15 = arith.addf %12, %14 : vector<1x128xf32>
    %16 = math.absf %15 : vector<1x128xf32>
    %cst_10 = arith.constant 0.000000e+00 : f32
    %17 = vector.broadcast %cst_10 : f32 to vector<1x128xf32>
    %18 = arith.subf %17, %16 : vector<1x128xf32>
    %19 = math.exp %18 : vector<1x128xf32>
    %cst_11 = arith.constant 1.000000e+00 : f32
    %20 = vector.broadcast %cst_11 : f32 to vector<1x128xf32>
    %21 = arith.addf %20, %19 : vector<1x128xf32>
    %cst_12 = arith.constant 1.000000e+00 : f32
    %22 = vector.broadcast %cst_12 : f32 to vector<1x128xf32>
    %23 = arith.divf %22, %21 : vector<1x128xf32>
    %cst_13 = arith.constant 0.000000e+00 : f32
    %24 = vector.broadcast %cst_13 : f32 to vector<1x128xf32>
    %25 = arith.cmpf oge, %15, %24 : vector<1x128xf32>
    %26 = arith.mulf %19, %23 : vector<1x128xf32>
    %27 = arith.select %25, %23, %26 : vector<1x128xi1>, vector<1x128xf32>
    %c0_14 = arith.constant 0 : index
    %c0_15 = arith.constant 0 : index
    %28 = vector.load %arg6[%c0_14, %c0_15] : memref<1x128xf32, #tpu.memory_space<vmem>>, vector<1x128xf32>
    tpu.vector_store %arg6[%c0_14, %c0_15], %27 {strides = array<i32>} : memref<1x128xf32, #tpu.memory_space<vmem>>, vector<1x128xf32>,
    return
  }
  func.func @transform_0(%arg0: i32) -> (i32, i32) {
    %c0_i32 = arith.constant 0 : i32
    %c0_i32_0 = arith.constant 0 : i32
    return %arg0, %c0_i32 : i32, i32
  }
  func.func @transform_1(%arg0: i32) -> (i32, i32) {
    %c0_i32 = arith.constant 0 : i32
    %c0_i32_0 = arith.constant 0 : i32
    %c0_i32_1 = arith.constant 0 : i32
    return %c0_i32, %c0_i32_0 : i32, i32
  }
  func.func @transform_2(%arg0: i32) -> (i32, i32) {
    %c0_i32 = arith.constant 0 : i32
    %c0_i32_0 = arith.constant 0 : i32
    %c0_i32_1 = arith.constant 0 : i32
    return %c0_i32, %c0_i32_0 : i32, i32
  }
  func.func @transform_3(%arg0: i32) -> (i32, i32) {
    %c0_i32 = arith.constant 0 : i32
    %c0_i32_0 = arith.constant 0 : i32
    %c0_i32_1 = arith.constant 0 : i32
    return %c0_i32, %c0_i32_0 : i32, i32
  }
  func.func @transform_4(%arg0: i32) -> i32 {
    %c0_i32 = arith.constant 0 : i32
    %c0_i32_0 = arith.constant 0 : i32
    return %c0_i32 : i32
  }
  func.func @transform_5(%arg0: i32) -> (i32, i32) {
    %c0_i32 = arith.constant 0 : i32
    %c0_i32_0 = arith.constant 0 : i32
    return %c0_i32, %arg0 : i32, i32
  }
}

</mosaic_0001>

<llo_original>
// kernel: churn_forward.1
$region0: #{churn_forward.1}
  #allocation0 [shape = 'u32[]', space=smem, size = 0x4, offset = 0x4, fixed_abs, tag = 'smem constant byte address 0x4 - core index']
  #allocation1 [shape = 'u32[144,128]{1,0:T(1,128)}', space=vmem, size = 0x12000, scoped, tag = 'internal scratch']
  #allocation2 [shape = 'f32[1]{0:T(128)S(6)}', space=smem, size = 0x200, scoped, tag = 'scoped memory for churn_forward.1']
  %s0 = inlined_call_operand.vmem [shape: f32[8,16], index: 0, kind: input, shape index: {}]
  %s1 = inlined_call_operand.vmem [shape: f32[32,16], index: 1, kind: input, shape index: {}]
  %s2 = inlined_call_operand.vmem [shape: f32[32,1], index: 2, kind: input, shape index: {}]
  %s3 = inlined_call_operand.vmem [shape: f32[32,1], index: 3, kind: input, shape index: {}]
  %s4 = inlined_call_operand.<no memory space> [shape: f32[1], index: 4, kind: input, shape index: {}]
  %s5 = inlined_call_operand.hbm [shape: f32[1,8], index: 5, kind: output, shape index: {}]
  %s6 = sld [smem:[#allocation0]]
  $region30: #{churn_forward.1} parent=0
    _
  %s8 = ssub.s32 1, %s6
  %s9 = scalar_select 0, %s8, %s6
  %10 = sst [smem:[#allocation2]] %s4
  $region1: #{churn_forward.1} parent=0
    #allocation3 [shape = 'u8[512]{0}', space=vmem, size = 0x400, scoped, tag = 'output window, operand 0, single buffered']
    #allocation4 [shape = 's32[1]{0}', space=sflag, size = 0x4, scoped, tag = 'scoped memory for churn_forward.1']
    %11 = vsyncpa [#allocation4], 0
    // Predicated region
    $region2: #{churn_forward.1} parent=1 // pred_check
      _
    $region3: #{churn_forward.1} parent=1 // pred_check_branch
      %13 = sbr.rel (0) target = $region5
    $region4: #{churn_forward.1} parent=1 // pred_region
      _
    $region5: #{churn_forward.1} parent=1 // pred_fallthru
      _
    // Predicated region
    $region6: #{churn_forward.1} parent=1 // pred_check
      _
    $region7: #{churn_forward.1} parent=1 // pred_check_branch
      %15 = sbr.rel (0) target = $region9
    $region8: #{churn_forward.1} parent=1 // pred_region
      _
    $region9: #{churn_forward.1} parent=1 // pred_fallthru
      _
    // Predicated region
    $region10: #{churn_forward.1} parent=1 // pred_check
      _
    $region11: #{churn_forward.1} parent=1 // pred_check_branch
      %17 = sbr.rel (0) target = $region13
    $region12: #{churn_forward.1} parent=1 // pred_region
      _
    $region13: #{churn_forward.1} parent=1 // pred_fallthru
      _
    // Predicated region
    $region14: #{churn_forward.1} parent=1 // pred_check
      _
    $region15: #{churn_forward.1} parent=1 // pred_check_branch
      %19 = sbr.rel (0) target = $region17
    $region16: #{churn_forward.1} parent=1 // pred_region
      _
    $region17: #{churn_forward.1} parent=1 // pred_fallthru
      _
    // Predicated region
    $region18: #{churn_forward.1} parent=1 // pred_check
      _
    $region19: #{churn_forward.1} parent=1 // pred_check_branch
      %21 = sbr.rel (0) target = $region21
    $region20: #{churn_forward.1} parent=1 // pred_region
      _
    $region21: #{churn_forward.1} parent=1 // pred_fallthru
      _
    %v22 = vld [vmem:[%s1] sm:$0xff]
    %v23 = vld [vmem:[%s1 + $0x8] sm:$0xff]
    %v24 = vld [vmem:[%s1 + $0x10] sm:$0xff]
    %v25 = vld [vmem:[%s1 + $0x18] sm:$0xff]
    %v26 = vld [vmem:[%s0] sm:$0xff]
    %v27 = vld [vmem:[%s0 + $0x8] sm:$0xff]
    %v28 = vld [vmem:[%s0 + $0x10] sm:$0xff]
    %v29 = vld [vmem:[%s0 + $0x18] sm:$0xff]
    %v30 = vld [vmem:[%s0 + $0x20] sm:$0xff]
    %v31 = vld [vmem:[%s0 + $0x28] sm:$0xff]
    %v32 = vld [vmem:[%s0 + $0x30] sm:$0xff]
    %v33 = vld [vmem:[%s0 + $0x38] sm:$0xff]
    %v34 = vld [vmem:[%s0 + $0x40] sm:$0xff]
    %v35 = vld [vmem:[%s0 + $0x48] sm:$0xff]
    %v36 = vld [vmem:[%s0 + $0x50] sm:$0xff]
    %v37 = vld [vmem:[%s0 + $0x58] sm:$0xff]
    %v38 = vld [vmem:[%s0 + $0x60] sm:$0xff]
    %v39 = vld [vmem:[%s0 + $0x68] sm:$0xff]
    %v40 = vld [vmem:[%s0 + $0x70] sm:$0xff]
    %v41 = vld [vmem:[%s0 + $0x78] sm:$0xff]
    %v42 = vld [vmem:[%s2] sm:$0xff]
    %v43 = vld [vmem:[%s2 + $0x8] sm:$0xff]
    %v44 = vld [vmem:[%s2 + $0x10] sm:$0xff]
    %v45 = vld [vmem:[%s2 + $0x18] sm:$0xff]
    %47 = vset.pattern.permute.xlu0 0
    %48 = vperm.xlu0 %47, %v42
    %v49 = vpop.permute.xlu0 %48
    %52 = vset.pattern.permute.xlu0 0
    %53 = vperm.xlu0 %52, %v43
    %v54 = vpop.permute.xlu0 %53
    %57 = vset.pattern.permute.xlu0 0
    %58 = vperm.xlu0 %57, %v44
    %v59 = vpop.permute.xlu0 %58
    %62 = vset.pattern.permute.xlu0 0
    %63 = vperm.xlu0 %62, %v45
    %v64 = vpop.permute.xlu0 %63
    %vm66 = vcmask 130048
    %v68 = vsel %vm66, %v22, 0
    %v71 = vsel %vm66, %v23, 0
    %v74 = vsel %vm66, %v24, 0
    %v77 = vsel %vm66, %v25, 0
    %v80 = vsel %vm66, %v26, 0
    %v83 = vsel %vm66, %v27, 0
    %v86 = vsel %vm66, %v28, 0
    %v89 = vsel %vm66, %v29, 0
    %v92 = vsel %vm66, %v30, 0
    %v95 = vsel %vm66, %v31, 0
    %v98 = vsel %vm66, %v32, 0
    %v101 = vsel %vm66, %v33, 0
    %v104 = vsel %vm66, %v34, 0
    %v107 = vsel %vm66, %v35, 0
    %v110 = vsel %vm66, %v36, 0
    %v113 = vsel %vm66, %v37, 0
    %v116 = vsel %vm66, %v38, 0
    %v119 = vsel %vm66, %v39, 0
    %v122 = vsel %vm66, %v40, 0
    %v125 = vsel %vm66, %v41, 0
    %127 = vmatprep.subr.mxu0 0.0
    %128 = vmatpush1.xpose.msra.mxu0 %v80
    %129 = vmatprep.subr.mxu0 0.0
    %130 = vmatpush1.xpose.msra.mxu0 %v83
    %131 = vmatprep.subr.mxu0 0.0
    %132 = vmatpush1.xpose.msra.mxu0 %v86
    %133 = vmatprep.subr.mxu0 0.0
    %134 = vmatpush1.xpose.msra.mxu0 %v89
    %135 = vmatprep.subr.mxu0 0.0
    %136 = vmatpush1.xpose.msra.mxu0 %v92
    %137 = vmatprep.subr.mxu0 0.0
    %138 = vmatpush1.xpose.msra.mxu0 %v95
    %139 = vmatprep.subr.mxu0 0.0
    %140 = vmatpush1.xpose.msra.mxu0 %v98
    %141 = vmatprep.subr.mxu0 0.0
    %142 = vmatpush1.xpose.msra.mxu0 %v101
    %143 = vmatprep.subr.mxu0 0.0
    %144 = vmatpush1.xpose.msra.mxu0 %v104
    %145 = vmatprep.subr.mxu0 0.0
    %146 = vmatpush1.xpose.msra.mxu0 %v107
    %147 = vmatprep.subr.mxu0 0.0
    %148 = vmatpush1.xpose.msra.mxu0 %v110
    %149 = vmatprep.subr.mxu0 0.0
    %150 = vmatpush1.xpose.msra.mxu0 %v113
    %151 = vmatprep.subr.mxu0 0.0
    %152 = vmatpush1.xpose.msra.mxu0 %v116
    %153 = vmatprep.subr.mxu0 0.0
    %154 = vmatpush1.xpose.msra.mxu0 %v119
    %155 = vmatprep.subr.mxu0 0.0
    %156 = vmatpush1.xpose.msra.mxu0 %v122
    %157 = vmatprep.subr.mxu0 0.0
    %158 = vmatpush1.xpose.msra.mxu0 %v125
    %159 = vmatprep.subr.mxu0 0.0
    %160 = vmatpush1.xpose.msra.mxu0 0.0
    %161 = vmatprep.subr.mxu0 0.0
    %162 = vmatpush1.xpose.msra.mxu0 0.0
    %163 = vmatprep.subr.mxu0 0.0
    %164 = vmatpush1.xpose.msra.mxu0 0.0
    %165 = vmatprep.subr.mxu0 0.0
    %166 = vmatpush1.xpose.msra.mxu0 0.0
    %167 = vmatprep.subr.mxu0 0.0
    %168 = vmatpush1.xpose.msra.mxu0 0.0
    %169 = vmatprep.subr.mxu0 0.0
    %170 = vmatpush1.xpose.msra.mxu0 0.0
    %171 = vmatprep.subr.mxu0 0.0
    %172 = vmatpush1.xpose.msra.mxu0 0.0
    %173 = vmatprep.subr.mxu0 0.0
    %174 = vmatpush1.xpose.msra.mxu0 0.0
    %175 = vmatprep.subr.mxu0 0.0
    %176 = vmatpush1.xpose.msra.mxu0 0.0
    %177 = vmatprep.subr.mxu0 0.0
    %178 = vmatpush1.xpose.msra.mxu0 0.0
    %179 = vmatprep.subr.mxu0 0.0
    %180 = vmatpush1.xpose.msra.mxu0 0.0
    %181 = vmatprep.subr.mxu0 0.0
    %182 = vmatpush1.xpose.msra.mxu0 0.0
    %183 = vmatprep.subr.mxu0 0.0
    %184 = vmatpush1.xpose.msra.mxu0 0.0
    %185 = vmatprep.subr.mxu0 0.0
    %186 = vmatpush1.xpose.msra.mxu0 0.0
    %187 = vmatprep.subr.mxu0 0.0
    %188 = vmatpush1.xpose.msra.mxu0 0.0
    %189 = vmatprep.subr.mxu0 0.0
    %190 = vmatpush1.xpose.msra.mxu0 0.0
    %191 = vmatprep.mubr.f32.mxu0 0.0
    %192 = vmatmul.mubr.f32.gmra.mrb[0].mxu0 %v68
    %v193 = vpop.f32.mrb[0].mxu0
    %v194 = vadd.f32 %v49, %v193
    %v195 = vpop.f32.mrb[0].mxu0
    %196 = vmatprep.mubr.f32.mxu0 0.0
    %197 = vmatmul.mubr.f32.gmra.mrb[0].mxu0 %v71
    %v198 = vpop.f32.mrb[0].mxu0
    %v199 = vadd.f32 %v54, %v198
    %v200 = vpop.f32.mrb[0].mxu0
    %201 = vmatprep.mubr.f32.mxu0 0.0
    %202 = vmatmul.mubr.f32.gmra.mrb[0].mxu0 %v74
    %v203 = vpop.f32.mrb[0].mxu0
    %v204 = vadd.f32 %v59, %v203
    %v205 = vpop.f32.mrb[0].mxu0
    %206 = vmatprep.mubr.f32.mxu0 0.0
    %207 = vmatmul.mubr.f32.gmra.mrb[0].mxu0 %v77
    %v208 = vpop.f32.mrb[0].mxu0
    %v209 = vadd.f32 %v64, %v208
    %v210 = vpop.f32.mrb[0].mxu0
    %211 = vdwg.mxu0
    %v212 = vmax.f32 %v194, 0.0
    %v213 = vmax.f32 %v199, 0.0
    %v214 = vmax.f32 %v204, 0.0
    %v215 = vmax.f32 %v209, 0.0
    %v216 = vld [vmem:[%s3] sm:$0xff]
    %v217 = vld [vmem:[%s3 + $0x8] sm:$0xff]
    %v218 = vld [vmem:[%s3 + $0x10] sm:$0xff]
    %v219 = vld [vmem:[%s3 + $0x18] sm:$0xff]
    %221 = vset.pattern.permute.xlu0 0
    %222 = vperm.xlu0 %221, %v216
    %v223 = vpop.permute.xlu0 %222
    %226 = vset.pattern.permute.xlu0 0
    %227 = vperm.xlu0 %226, %v217
    %v228 = vpop.permute.xlu0 %227
    %231 = vset.pattern.permute.xlu0 0
    %232 = vperm.xlu0 %231, %v218
    %v233 = vpop.permute.xlu0 %232
    %236 = vset.pattern.permute.xlu0 0
    %237 = vperm.xlu0 %236, %v219
    %v238 = vpop.permute.xlu0 %237
    %v240 = vmul.f32 %v212, %v223
    %v241 = vmul.f32 %v213, %v228
    %v242 = vmul.f32 %v214, %v233
    %v243 = vmul.f32 %v215, %v238
    %v244 = vadd.f32 %v240, %v241
    %v245 = vadd.f32 %v244, %v242
    %v246 = vadd.f32 %v245, %v243
    %v247 = vrot.slane %v246, 4
    %v248 = vadd.f32 %v246, %v247
    %v249 = vrot.slane %v248, 2
    %v250 = vadd.f32 %v248, %v249
    %v251 = vrot.slane %v250, 1
    %v252 = vadd.f32 %v250, %v251
    %s253 = sld [smem:[#allocation2]]
    %v254 = vstv %s253
    %v255 = vadd.f32 %v252, %v254
    %v256 = vand.u32 2147483647, %v255
    %v257 = vsub.f32 0.0, %v256
    %v258 = vmul.f32 %v257, 1.442695
    %v259 = vpow.pop %v258
    %v260 = vadd.f32 %v259, 1.0
    %v261 = vrcp.pop %v260
    %v262 = vmul.f32 1.0, %v261
    %vm263 = vcmp.ge.f32.partialorder %v255, 0.0
    %v264 = vmul.f32 %v259, %v262
    %v265 = vsel %vm263, %v262, %v264
    %266 = vst [vmem:[#allocation3] sm:$0x1] %v265
    // Predicated region
    $region22: #{churn_forward.1} parent=1 // pred_check
      _
    $region23: #{churn_forward.1} parent=1 // pred_check_branch
      %268 = sbr.rel (0) target = $region25
    $region24: #{churn_forward.1} parent=1 // pred_region
      %s270 = ssub.s32 16, 16
      %271 = vsyncadd [#allocation4], %s270
      %s273 = sshll.u32 [#allocation3], 4
      %s274 = int_to_ptr.vmem [resolvable:$true] %s273
      %276 = dma.vmem_to_hbm [thread:$0]  %s274, 16, %s5, [#allocation4]
    $region25: #{churn_forward.1} parent=1 // pred_fallthru
      _
    // Predicated region
    $region26: #{churn_forward.1} parent=1 // pred_check
      _
    $region27: #{churn_forward.1} parent=1 // pred_check_branch
      %278 = sbr.rel (0) target = $region29
    $region28: #{churn_forward.1} parent=1 // pred_region
      %279 = dma.done [#allocation4], 16
    $region29: #{churn_forward.1} parent=1 // pred_fallthru
      _
    %280 = vsyncpa [#allocation4], 1

</llo_original>
